<compile_context>
chip_gen: v7x
topology: tpu7x:2x2x1
jax: 0.10.0
libtpu: 0.0.40
codegen_flags: <defaults>
</compile_context>

<pallas_src>
import functools

import jax
import jax.numpy as jnp
from jax.experimental import pallas as pl
from jax.experimental.pallas import tpu as pltpu


# ----------------------------------------------------------------------------
# Pallas kernel: fused MLP (Linear + ReLU per layer) + LTC state-update epilogue.
# ----------------------------------------------------------------------------
def _ltc_fused_kernel(x_ref, hidden_ref, *refs, num_layers, tau, A, step_size):
    """refs = (w0x, b0_eff, w1, b1, ..., ltc_out_ref, new_hidden_ref).

    Layer 0's hidden-state contribution is pre-folded into b0_eff on the host,
    so the kernel streams only the raw input `x` (no broadcast / concat).
    """
    out_ref, newh_ref = refs[-2], refs[-1]
    wb = refs[:-2]

    h = x_ref[...]                                   # (seq_tile, features) f32
    for i in range(num_layers):
        w = wb[2 * i][...]                           # (d_in, d_out)
        b = wb[2 * i + 1][...]                       # (1, d_out) -> broadcasts
        h = jnp.dot(h, w, preferred_element_type=jnp.float32) + b
        h = jnp.maximum(h, 0.0)                      # nn.ReLU

    out_ref[...] = h.astype(out_ref.dtype)           # ltc_output

    # Fused LTC state update:
    #   num = hidden + step*out*A ; den = 1 + step*(1/tau + out)
    hid = hidden_ref[...]                            # (1, d_hidden) broadcast
    num = hid + (step_size * A) * h
    den = 1.0 + step_size * ((1.0 / tau) + h)        # > 0 since out >= 0 (ReLU)
    newh_ref[...] = (num / den).astype(newh_ref.dtype)


# ----------------------------------------------------------------------------
# Wrapper: forward_2d + state update in one pallas_call.
# ----------------------------------------------------------------------------
def ltc_forward_2d_fused(x, hidden, weights, biases, *, tau, A, step_size,
                         seq_tile=None):
    """Returns (ltc_output, new_hidden), both (seq_len, hidden_features)."""
    seq_len, features = x.shape
    d_hidden = weights[-1].shape[1]
    hid2d = hidden.reshape(1, -1).astype(jnp.float32)

    # --- Fold the hidden-state contribution into layer-0's bias (tiny XLA op). ---
    w0, b0 = weights[0], biases[0]
    w0x = w0[:features, :]                            # (features, d1)
    w0h = w0[features:, :]                            # (d_hidden, d1)
    b0_eff = hid2d @ w0h + b0.reshape(1, -1)          # (1, d1)

    kernel_weights = [w0x] + list(weights[1:])
    kernel_biases = [b0_eff] + [b.reshape(1, -1) for b in biases[1:]]
    num_layers = len(kernel_weights)

    # --- Tile choice: multiple of 8 sublanes, cap at 256 rows per block. ---
    if seq_tile is None:
        aligned = max(8, pl.cdiv(seq_len, 8) * 8)
        seq_tile = min(aligned, 256)
    n_blocks = pl.cdiv(seq_len, seq_tile)
    padded_len = n_blocks * seq_tile
    x_p = x if padded_len == seq_len else jnp.pad(
        x, ((0, padded_len - seq_len), (0, 0)))

    in_specs = [
        pl.BlockSpec((seq_tile, features), lambda i: (i, 0)),   # input tile
        pl.BlockSpec((1, d_hidden), lambda i: (0, 0)),          # hidden row
    ]
    wb_args = []
    for w, b in zip(kernel_weights, kernel_biases):
        in_specs.append(pl.BlockSpec(w.shape, lambda i: (0, 0)))  # grid-invariant
        in_specs.append(pl.BlockSpec(b.shape, lambda i: (0, 0)))
        wb_args.append(w.astype(jnp.float32))
        wb_args.append(b.astype(jnp.float32))

    out_specs = (
        pl.BlockSpec((seq_tile, d_hidden), lambda i: (i, 0)),   # ltc_output
        pl.BlockSpec((seq_tile, d_hidden), lambda i: (i, 0)),   # new hidden seq
    )
    out_shape = (
        jax.ShapeDtypeStruct((padded_len, d_hidden), jnp.float32),
        jax.ShapeDtypeStruct((padded_len, d_hidden), jnp.float32),
    )

    # Advisory cost estimate so XLA schedules this tiny call correctly.
    flops_per_row = sum(2 * w.shape[0] * w.shape[1] for w in kernel_weights)
    flops = padded_len * (flops_per_row + 6 * d_hidden)
    bytes_accessed = 4 * (
        x_p.size + hid2d.size
        + sum(int(w.size) for w in kernel_weights)
        + sum(int(b.size) for b in kernel_biases)
        + 2 * padded_len * d_hidden)

    kernel = functools.partial(
        _ltc_fused_kernel,
        num_layers=num_layers, tau=tau, A=A, step_size=step_size)

    ltc_out, new_hidden = pl.pallas_call(
        kernel,
        out_shape=out_shape,
        grid=(n_blocks,),
        in_specs=in_specs,
        out_specs=out_specs,
        compiler_params=pltpu.CompilerParams(
            dimension_semantics=("parallel",)),
        cost_estimate=pl.CostEstimate(
            flops=flops, transcendentals=0, bytes_accessed=bytes_accessed),
    )(x_p, hid2d, *wb_args)

    if padded_len != seq_len:
        ltc_out = ltc_out[:seq_len]
        new_hidden = new_hidden[:seq_len]
    return ltc_out, new_hidden


# ----------------------------------------------------------------------------
# Pure-JAX reference (mirrors the PyTorch module) for verification.
# ----------------------------------------------------------------------------
def ltc_forward_2d_ref(x, hidden, weights, biases):
    seq_len, _ = x.shape
    hid = jnp.broadcast_to(hidden.reshape(1, -1), (seq_len, hidden.size))
    h = jnp.concatenate([x, hid], axis=1)
    for w, b in zip(weights, biases):
        h = jnp.maximum(h @ w + b, 0.0)
    return h


# ----------------------------------------------------------------------------
# Deterministic parameter init (matches nn.Linear shapes; synthetic weights).
# ----------------------------------------------------------------------------
def init_ltc_params(key, ltc_layers):
    """ltc_layers = [in0, out0(=in1), out1, ...]; weights stored as (in, out)."""
    weights, biases = [], []
    for i in range(len(ltc_layers) - 1):
        fan_in, fan_out = ltc_layers[i], ltc_layers[i + 1]
        key, kw, kb = jax.random.split(key, 3)
        bound = 1.0 / jnp.sqrt(jnp.float32(fan_in))
        # PyTorch Linear weight is (out, in); we store its transpose (in, out).
        w = jax.random.uniform(kw, (fan_in, fan_out), jnp.float32, -bound, bound)
        b = jax.random.uniform(kb, (fan_out,), jnp.float32, -bound, bound)
        weights.append(w)
        biases.append(b)
    return weights, biases


def _check(x, hidden_state, weights, biases, tau, A, step_size):
    ltc_out, new_hidden = ltc_forward_2d_fused(
        x, hidden_state, weights, biases, tau=tau, A=A, step_size=step_size)
    ltc_out = jax.block_until_ready(ltc_out)
    new_hidden = jax.block_until_ready(new_hidden)

    ref_out = ltc_forward_2d_ref(x, hidden_state, weights, biases)
    ref_num = hidden_state + step_size * ref_out * A
    ref_den = 1.0 + step_size * (1.0 / tau + ref_out)
    ref_new_hidden = ref_num / ref_den

    assert ltc_out.shape == ref_out.shape
    assert new_hidden.shape == ref_new_hidden.shape
    assert jnp.allclose(ltc_out, ref_out, atol=1e-5, rtol=1e-5), "ltc_output mismatch"
    assert jnp.allclose(new_hidden, ref_new_hidden, atol=1e-5, rtol=1e-5), \
        "new_hidden mismatch"
    return ltc_out, new_hidden


if __name__ == "__main__":
    # Small, LTC-consistent shapes:
    #   features = 16 (post-PCA feature dim), hidden = 32, seq_len = 8
    #   LTC_layers = [features + hidden, 64, hidden] -> Linear(48->64), Linear(64->32)
    tau, A, step_size = 0.99, 1.0, 0.01
    seq_len, features, hidden_dim = 8, 16, 32
    ltc_layers = [features + hidden_dim, 64, hidden_dim]

    key = jax.random.PRNGKey(0)
    key, kx, kh = jax.random.split(key, 3)
    x = jax.random.normal(kx, (seq_len, features), jnp.float32)
    hidden_state = jax.random.normal(kh, (1, hidden_dim), jnp.float32)
    weights, biases = init_ltc_params(key, ltc_layers)

    # ltc_output = ltc.forward_2d(test_tensor, hidden_state)  + fused state update.
    _check(x, hidden_state, weights, biases, tau, A, step_size)

    # Exercise the multi-block / padded-sequence path (tile=256, 2 grid steps).
    key, kx2 = jax.random.split(key)
    x_big = jax.random.normal(kx2, (272, features), jnp.float32)
    _check(x_big, hidden_state, weights, biases, tau, A, step_size)

    # TODO(synk): load_ltc / load_pca_info / apply_pca_transform read .pth/.pkl
    # checkpoints from disk; parameters are synthesized deterministically here.
    print("KERNEL_OK")
</pallas_src>

<mosaic_0001>
module attributes {stable_mosaic.version = 11 : i64} {
  func.func @_ltc_fused_kernel(%arg0: i32, %arg1: memref<8x16xf32, #tpu.memory_space<vmem>>, %arg2: memref<1x32xf32, #tpu.memory_space<vmem>>, %arg3: memref<16x64xf32, #tpu.memory_space<vmem>>, %arg4: memref<1x64xf32, #tpu.memory_space<vmem>>, %arg5: memref<64x32xf32, #tpu.memory_space<vmem>>, %arg6: memref<1x32xf32, #tpu.memory_space<vmem>>, %arg7: memref<8x32xf32, #tpu.memory_space<vmem>>, %arg8: memref<8x32xf32, #tpu.memory_space<vmem>>) attributes {dimension_semantics = [#tpu.dimension_semantics<parallel>], iteration_bounds = array<i64: 1>, scalar_prefetch = 0 : i64, scratch_operands = 0 : i64, tpu.core_type = #tpu.core_type<tc>, window_params = [{transform_indices = @transform_0, window_bounds = array<i64: 8, 16>}, {pipeline_mode = #tpu.pipeline_mode<synchronous>, transform_indices = @transform_1, window_bounds = array<i64: 1, 32>}, {pipeline_mode = #tpu.pipeline_mode<synchronous>, transform_indices = @transform_2, window_bounds = array<i64: 16, 64>}, {pipeline_mode = #tpu.pipeline_mode<synchronous>, transform_indices = @transform_3, window_bounds = array<i64: 1, 64>}, {pipeline_mode = #tpu.pipeline_mode<synchronous>, transform_indices = @transform_4, window_bounds = array<i64: 64, 32>}, {pipeline_mode = #tpu.pipeline_mode<synchronous>, transform_indices = @transform_5, window_bounds = array<i64: 1, 32>}, {transform_indices = @transform_6, window_bounds = array<i64: 8, 32>}, {transform_indices = @transform_7, window_bounds = array<i64: 8, 32>}]} {
    %c0 = arith.constant 0 : index
    %c0_0 = arith.constant 0 : index
    %0 = vector.load %arg1[%c0, %c0_0] : memref<8x16xf32, #tpu.memory_space<vmem>>, vector<8x16xf32>
    %c0_1 = arith.constant 0 : index
    %c0_2 = arith.constant 0 : index
    %1 = vector.load %arg3[%c0_1, %c0_2] : memref<16x64xf32, #tpu.memory_space<vmem>>, vector<16x64xf32>
    %c0_3 = arith.constant 0 : index
    %c0_4 = arith.constant 0 : index
    %2 = vector.load %arg4[%c0_3, %c0_4] : memref<1x64xf32, #tpu.memory_space<vmem>>, vector<1x64xf32>
    %cst = arith.constant dense<0.000000e+00> : vector<8x64xf32>
    %3 = tpu.matmul %0, %1, %cst {dimension_numbers = #tpu.dot_dimension_numbers<[1], [0], [0], [1], [0, 0, 1, 1], [], []>} : vector<8x16xf32>, vector<16x64xf32>, vector<8x64xf32> -> vector<8x64xf32>
    %4 = vector.broadcast %2 : vector<1x64xf32> to vector<8x64xf32>
    %5 = arith.addf %3, %4 : vector<8x64xf32>
    %cst_5 = arith.constant 0.000000e+00 : f32
    %6 = vector.broadcast %cst_5 : f32 to vector<8x64xf32>
    %7 = arith.maximumf %5, %6 : vector<8x64xf32>
    %c0_6 = arith.constant 0 : index
    %c0_7 = arith.constant 0 : index
    %8 = vector.load %arg5[%c0_6, %c0_7] : memref<64x32xf32, #tpu.memory_space<vmem>>, vector<64x32xf32>
    %c0_8 = arith.constant 0 : index
    %c0_9 = arith.constant 0 : index
    %9 = vector.load %arg6[%c0_8, %c0_9] : memref<1x32xf32, #tpu.memory_space<vmem>>, vector<1x32xf32>
    %cst_10 = arith.constant dense<0.000000e+00> : vector<8x32xf32>
    %10 = tpu.matmul %7, %8, %cst_10 {dimension_numbers = #tpu.dot_dimension_numbers<[1], [0], [0], [1], [0, 0, 1, 1], [], []>} : vector<8x64xf32>, vector<64x32xf32>, vector<8x32xf32> -> vector<8x32xf32>
    %11 = vector.broadcast %9 : vector<1x32xf32> to vector<8x32xf32>
    %12 = arith.addf %10, %11 : vector<8x32xf32>
    %cst_11 = arith.constant 0.000000e+00 : f32
    %13 = vector.broadcast %cst_11 : f32 to vector<8x32xf32>
    %14 = arith.maximumf %12, %13 : vector<8x32xf32>
    %c0_12 = arith.constant 0 : index
    %c0_13 = arith.constant 0 : index
    %15 = vector.load %arg7[%c0_12, %c0_13] : memref<8x32xf32, #tpu.memory_space<vmem>>, vector<8x32xf32>
    tpu.vector_store %arg7[%c0_12, %c0_13], %14 {strides = array<i32>} : memref<8x32xf32, #tpu.memory_space<vmem>>, vector<8x32xf32>,
    %c0_14 = arith.constant 0 : index
    %c0_15 = arith.constant 0 : index
    %16 = vector.load %arg2[%c0_14, %c0_15] : memref<1x32xf32, #tpu.memory_space<vmem>>, vector<1x32xf32>
    %cst_16 = arith.constant 0.00999999977 : f32
    %17 = vector.broadcast %cst_16 : f32 to vector<8x32xf32>
    %18 = arith.mulf %17, %14 : vector<8x32xf32>
    %19 = vector.broadcast %16 : vector<1x32xf32> to vector<8x32xf32>
    %20 = arith.addf %19, %18 : vector<8x32xf32>
    %cst_17 = arith.constant 1.01010096 : f32
    %21 = vector.broadcast %cst_17 : f32 to vector<8x32xf32>
    %22 = arith.addf %21, %14 : vector<8x32xf32>
    %cst_18 = arith.constant 0.00999999977 : f32
    %23 = vector.broadcast %cst_18 : f32 to vector<8x32xf32>
    %24 = arith.mulf %23, %22 : vector<8x32xf32>
    %cst_19 = arith.constant 1.000000e+00 : f32
    %25 = vector.broadcast %cst_19 : f32 to vector<8x32xf32>
    %26 = arith.addf %25, %24 : vector<8x32xf32>
    %27 = arith.divf %20, %26 : vector<8x32xf32>
    %c0_20 = arith.constant 0 : index
    %c0_21 = arith.constant 0 : index
    %28 = vector.load %arg8[%c0_20, %c0_21] : memref<8x32xf32, #tpu.memory_space<vmem>>, vector<8x32xf32>
    tpu.vector_store %arg8[%c0_20, %c0_21], %27 {strides = array<i32>} : memref<8x32xf32, #tpu.memory_space<vmem>>, vector<8x32xf32>,
    return
  }
  func.func @transform_0(%arg0: i32) -> (i32, i32) {
    %c0_i32 = arith.constant 0 : i32
    %c0_i32_0 = arith.constant 0 : i32
    return %arg0, %c0_i32 : i32, i32
  }
  func.func @transform_1(%arg0: i32) -> (i32, i32) {
    %c0_i32 = arith.constant 0 : i32
    %c0_i32_0 = arith.constant 0 : i32
    %c0_i32_1 = arith.constant 0 : i32
    return %c0_i32, %c0_i32_0 : i32, i32
  }
  func.func @transform_2(%arg0: i32) -> (i32, i32) {
    %c0_i32 = arith.constant 0 : i32
    %c0_i32_0 = arith.constant 0 : i32
    %c0_i32_1 = arith.constant 0 : i32
    return %c0_i32, %c0_i32_0 : i32, i32
  }
  func.func @transform_3(%arg0: i32) -> (i32, i32) {
    %c0_i32 = arith.constant 0 : i32
    %c0_i32_0 = arith.constant 0 : i32
    %c0_i32_1 = arith.constant 0 : i32
    return %c0_i32, %c0_i32_0 : i32, i32
  }
  func.func @transform_4(%arg0: i32) -> (i32, i32) {
    %c0_i32 = arith.constant 0 : i32
    %c0_i32_0 = arith.constant 0 : i32
    %c0_i32_1 = arith.constant 0 : i32
    return %c0_i32, %c0_i32_0 : i32, i32
  }
  func.func @transform_5(%arg0: i32) -> (i32, i32) {
    %c0_i32 = arith.constant 0 : i32
    %c0_i32_0 = arith.constant 0 : i32
    %c0_i32_1 = arith.constant 0 : i32
    return %c0_i32, %c0_i32_0 : i32, i32
  }
  func.func @transform_6(%arg0: i32) -> (i32, i32) {
    %c0_i32 = arith.constant 0 : i32
    %c0_i32_0 = arith.constant 0 : i32
    return %arg0, %c0_i32 : i32, i32
  }
  func.func @transform_7(%arg0: i32) -> (i32, i32) {
    %c0_i32 = arith.constant 0 : i32
    %c0_i32_0 = arith.constant 0 : i32
    return %arg0, %c0_i32 : i32, i32
  }
}

</mosaic_0001>

<llo_original>
// kernel: tpu_custom_call.1
$region0: #{tpu_custom_call.1}
  #allocation0 [shape = 'u32[]', space=smem, size = 0x4, offset = 0x4, fixed_abs, tag = 'smem constant byte address 0x4 - core index']
  #allocation1 [shape = 'u32[144,128]{1,0:T(1,128)}', space=vmem, size = 0x12000, scoped, tag = 'internal scratch']
  %s0 = inlined_call_operand.vmem [shape: f32[8,16], index: 0, kind: input, shape index: {}]
  %s1 = inlined_call_operand.vmem [shape: f32[1,32], index: 1, kind: input, shape index: {}]
  %s2 = inlined_call_operand.vmem [shape: f32[16,64], index: 2, kind: input, shape index: {}]
  %s3 = inlined_call_operand.vmem [shape: f32[1,64], index: 3, kind: input, shape index: {}]
  %s4 = inlined_call_operand.vmem [shape: f32[64,32], index: 4, kind: input, shape index: {}]
  %s5 = inlined_call_operand.vmem [shape: f32[1,32], index: 5, kind: input, shape index: {}]
  %s6 = inlined_call_operand.hbm [shape: f32[8,32], index: 6, kind: output, shape index: {0}]
  %s7 = inlined_call_operand.hbm [shape: f32[8,32], index: 7, kind: output, shape index: {1}]
  %8 = xla_tuple %s6, %s7
  %s9 = sld [smem:[#allocation0]]
  $region42: #{tpu_custom_call.1} parent=0
    _
  %s11 = ssub.s32 1, %s9
  %s12 = scalar_select 0, %s11, %s9
  $region1: #{tpu_custom_call.1} parent=0
    #allocation2 [shape = 'u8[4096]{0}', space=vmem, size = 0x1000, scoped, tag = 'output window, operand 0, single buffered']
    #allocation3 [shape = 's32[1]{0}', space=sflag, size = 0x4, scoped, tag = 'scoped memory for tpu_custom_call.1']
    #allocation4 [shape = 'u8[4096]{0}', space=vmem, size = 0x1000, scoped, tag = 'output window, operand 1, single buffered']
    #allocation5 [shape = 's32[1]{0}', space=sflag, size = 0x4, scoped, tag = 'scoped memory for tpu_custom_call.1']
    %13 = vsyncpa [#allocation3], 0
    %14 = vsyncpa [#allocation5], 0
    // Predicated region
    $region2: #{tpu_custom_call.1} parent=1 // pred_check
      _
    $region3: #{tpu_custom_call.1} parent=1 // pred_check_branch
      %16 = sbr.rel (0) target = $region5
    $region4: #{tpu_custom_call.1} parent=1 // pred_region
      _
    $region5: #{tpu_custom_call.1} parent=1 // pred_fallthru
      _
    // Predicated region
    $region6: #{tpu_custom_call.1} parent=1 // pred_check
      _
    $region7: #{tpu_custom_call.1} parent=1 // pred_check_branch
      %18 = sbr.rel (0) target = $region9
    $region8: #{tpu_custom_call.1} parent=1 // pred_region
      _
    $region9: #{tpu_custom_call.1} parent=1 // pred_fallthru
      _
    // Predicated region
    $region10: #{tpu_custom_call.1} parent=1 // pred_check
      _
    $region11: #{tpu_custom_call.1} parent=1 // pred_check_branch
      %20 = sbr.rel (0) target = $region13
    $region12: #{tpu_custom_call.1} parent=1 // pred_region
      _
    $region13: #{tpu_custom_call.1} parent=1 // pred_fallthru
      _
    // Predicated region
    $region14: #{tpu_custom_call.1} parent=1 // pred_check
      _
    $region15: #{tpu_custom_call.1} parent=1 // pred_check_branch
      %22 = sbr.rel (0) target = $region17
    $region16: #{tpu_custom_call.1} parent=1 // pred_region
      _
    $region17: #{tpu_custom_call.1} parent=1 // pred_fallthru
      _
    // Predicated region
    $region18: #{tpu_custom_call.1} parent=1 // pred_check
      _
    $region19: #{tpu_custom_call.1} parent=1 // pred_check_branch
      %24 = sbr.rel (0) target = $region21
    $region20: #{tpu_custom_call.1} parent=1 // pred_region
      _
    $region21: #{tpu_custom_call.1} parent=1 // pred_fallthru
      _
    // Predicated region
    $region22: #{tpu_custom_call.1} parent=1 // pred_check
      _
    $region23: #{tpu_custom_call.1} parent=1 // pred_check_branch
      %26 = sbr.rel (0) target = $region25
    $region24: #{tpu_custom_call.1} parent=1 // pred_region
      _
    $region25: #{tpu_custom_call.1} parent=1 // pred_fallthru
      _
    %v27 = vld [vmem:[%s0] sm:$0xff]
    %v28 = vld [vmem:[%s2] sm:$0xff]
    %v29 = vld [vmem:[%s2 + $0x8] sm:$0xff]
    %v30 = vld [vmem:[%s3] sm:$0x1]
    %v32 = vlaneseq
    %v33 = vshrl.u32 %v32, 7
    %v34 = vsub.s32 0, %v33
    %v35 = vrot.slane %v30, %v34
    %vm37 = vcmask 130048
    %v39 = vsel %vm37, %v27, 0
    %41 = vmatprep.subr.mxu0 0.0
    %42 = vmatpush1.msra.mxu0 %v28
    %43 = vmatprep.subr.mxu0 0.0
    %44 = vmatpush1.msra.mxu0 %v29
    %45 = vmatprep.subr.mxu0 0.0
    %46 = vmatpush1.msra.mxu0 0.0
    %47 = vmatprep.subr.mxu0 0.0
    %48 = vmatpush1.msra.mxu0 0.0
    %49 = vmatprep.subr.mxu0 0.0
    %50 = vmatpush1.msra.mxu0 0.0
    %51 = vmatprep.subr.mxu0 0.0
    %52 = vmatpush1.msra.mxu0 0.0
    %53 = vmatprep.subr.mxu0 0.0
    %54 = vmatpush1.msra.mxu0 0.0
    %55 = vmatprep.subr.mxu0 0.0
    %56 = vmatpush1.msra.mxu0 0.0
    %57 = vmatprep.subr.mxu0 0.0
    %58 = vmatpush1.msra.mxu0 0.0
    %59 = vmatprep.subr.mxu0 0.0
    %60 = vmatpush1.msra.mxu0 0.0
    %61 = vmatprep.subr.mxu0 0.0
    %62 = vmatpush1.msra.mxu0 0.0
    %63 = vmatprep.subr.mxu0 0.0
    %64 = vmatpush1.msra.mxu0 0.0
    %65 = vmatprep.subr.mxu0 0.0
    %66 = vmatpush1.msra.mxu0 0.0
    %67 = vmatprep.subr.mxu0 0.0
    %68 = vmatpush1.msra.mxu0 0.0
    %69 = vmatprep.subr.mxu0 0.0
    %70 = vmatpush1.msra.mxu0 0.0
    %71 = vmatprep.subr.mxu0 0.0
    %72 = vmatpush1.msra.mxu0 0.0
    %73 = vmatprep.subr.mxu0 0.0
    %74 = vmatpush1.msra.mxu0 0.0
    %75 = vmatprep.subr.mxu0 0.0
    %76 = vmatpush1.msra.mxu0 0.0
    %77 = vmatprep.subr.mxu0 0.0
    %78 = vmatpush1.msra.mxu0 0.0
    %79 = vmatprep.subr.mxu0 0.0
    %80 = vmatpush1.msra.mxu0 0.0
    %81 = vmatprep.subr.mxu0 0.0
    %82 = vmatpush1.msra.mxu0 0.0
    %83 = vmatprep.subr.mxu0 0.0
    %84 = vmatpush1.msra.mxu0 0.0
    %85 = vmatprep.subr.mxu0 0.0
    %86 = vmatpush1.msra.mxu0 0.0
    %87 = vmatprep.subr.mxu0 0.0
    %88 = vmatpush1.msra.mxu0 0.0
    %89 = vmatprep.subr.mxu0 0.0
    %90 = vmatpush1.msra.mxu0 0.0
    %91 = vmatprep.subr.mxu0 0.0
    %92 = vmatpush1.msra.mxu0 0.0
    %93 = vmatprep.subr.mxu0 0.0
    %94 = vmatpush1.msra.mxu0 0.0
    %95 = vmatprep.subr.mxu0 0.0
    %96 = vmatpush1.msra.mxu0 0.0
    %97 = vmatprep.subr.mxu0 0.0
    %98 = vmatpush1.msra.mxu0 0.0
    %99 = vmatprep.subr.mxu0 0.0
    %100 = vmatpush1.msra.mxu0 0.0
    %101 = vmatprep.subr.mxu0 0.0
    %102 = vmatpush1.msra.mxu0 0.0
    %103 = vmatprep.subr.mxu0 0.0
    %104 = vmatpush1.msra.mxu0 0.0
    %105 = vmatprep.mubr.f32.mxu0 0.0
    %106 = vmatmul.mubr.f32.gmra.mrb[0].mxu0 %v39
    %v107 = vpop.f32.mrb[0].mxu0
    %v108 = vadd.f32 %v35, %v107
    %v109 = vpop.f32.mrb[0].mxu0
    %110 = vdwg.mxu0
    %v111 = vmax.f32 %v108, 0.0
    %v112 = vld [vmem:[%s4] sm:$0xff]
    %v113 = vld [vmem:[%s4 + $0x8] sm:$0xff]
    %v114 = vld [vmem:[%s4 + $0x10] sm:$0xff]
    %v115 = vld [vmem:[%s4 + $0x18] sm:$0xff]
    %v116 = vld [vmem:[%s4 + $0x20] sm:$0xff]
    %v117 = vld [vmem:[%s4 + $0x28] sm:$0xff]
    %v118 = vld [vmem:[%s4 + $0x30] sm:$0xff]
    %v119 = vld [vmem:[%s4 + $0x38] sm:$0xff]
    %v120 = vld [vmem:[%s5] sm:$0x1]
    %v122 = vlaneseq
    %v123 = vshrl.u32 %v122, 7
    %v124 = vsub.s32 0, %v123
    %v125 = vrot.slane %v120, %v124
    %vm127 = vcmask 523264
    %v129 = vsel %vm127, %v111, 0
    %131 = vmatprep.subr.mxu0 0.0
    %132 = vmatpush1.msra.mxu0 %v112
    %133 = vmatprep.subr.mxu0 0.0
    %134 = vmatpush1.msra.mxu0 %v113
    %135 = vmatprep.subr.mxu0 0.0
    %136 = vmatpush1.msra.mxu0 %v114
    %137 = vmatprep.subr.mxu0 0.0
    %138 = vmatpush1.msra.mxu0 %v115
    %139 = vmatprep.subr.mxu0 0.0
    %140 = vmatpush1.msra.mxu0 %v116
    %141 = vmatprep.subr.mxu0 0.0
    %142 = vmatpush1.msra.mxu0 %v117
    %143 = vmatprep.subr.mxu0 0.0
    %144 = vmatpush1.msra.mxu0 %v118
    %145 = vmatprep.subr.mxu0 0.0
    %146 = vmatpush1.msra.mxu0 %v119
    %147 = vmatprep.subr.mxu0 0.0
    %148 = vmatpush1.msra.mxu0 0.0
    %149 = vmatprep.subr.mxu0 0.0
    %150 = vmatpush1.msra.mxu0 0.0
    %151 = vmatprep.subr.mxu0 0.0
    %152 = vmatpush1.msra.mxu0 0.0
    %153 = vmatprep.subr.mxu0 0.0
    %154 = vmatpush1.msra.mxu0 0.0
    %155 = vmatprep.subr.mxu0 0.0
    %156 = vmatpush1.msra.mxu0 0.0
    %157 = vmatprep.subr.mxu0 0.0
    %158 = vmatpush1.msra.mxu0 0.0
    %159 = vmatprep.subr.mxu0 0.0
    %160 = vmatpush1.msra.mxu0 0.0
    %161 = vmatprep.subr.mxu0 0.0
    %162 = vmatpush1.msra.mxu0 0.0
    %163 = vmatprep.subr.mxu0 0.0
    %164 = vmatpush1.msra.mxu0 0.0
    %165 = vmatprep.subr.mxu0 0.0
    %166 = vmatpush1.msra.mxu0 0.0
    %167 = vmatprep.subr.mxu0 0.0
    %168 = vmatpush1.msra.mxu0 0.0
    %169 = vmatprep.subr.mxu0 0.0
    %170 = vmatpush1.msra.mxu0 0.0
    %171 = vmatprep.subr.mxu0 0.0
    %172 = vmatpush1.msra.mxu0 0.0
    %173 = vmatprep.subr.mxu0 0.0
    %174 = vmatpush1.msra.mxu0 0.0
    %175 = vmatprep.subr.mxu0 0.0
    %176 = vmatpush1.msra.mxu0 0.0
    %177 = vmatprep.subr.mxu0 0.0
    %178 = vmatpush1.msra.mxu0 0.0
    %179 = vmatprep.subr.mxu0 0.0
    %180 = vmatpush1.msra.mxu0 0.0
    %181 = vmatprep.subr.mxu0 0.0
    %182 = vmatpush1.msra.mxu0 0.0
    %183 = vmatprep.subr.mxu0 0.0
    %184 = vmatpush1.msra.mxu0 0.0
    %185 = vmatprep.subr.mxu0 0.0
    %186 = vmatpush1.msra.mxu0 0.0
    %187 = vmatprep.subr.mxu0 0.0
    %188 = vmatpush1.msra.mxu0 0.0
    %189 = vmatprep.subr.mxu0 0.0
    %190 = vmatpush1.msra.mxu0 0.0
    %191 = vmatprep.subr.mxu0 0.0
    %192 = vmatpush1.msra.mxu0 0.0
    %193 = vmatprep.subr.mxu0 0.0
    %194 = vmatpush1.msra.mxu0 0.0
    %195 = vmatprep.mubr.f32.mxu0 0.0
    %196 = vmatmul.mubr.f32.gmra.mrb[0].mxu0 %v129
    %v197 = vpop.f32.mrb[0].mxu0
    %v198 = vadd.f32 %v125, %v197
    %v199 = vpop.f32.mrb[0].mxu0
    %200 = vdwg.mxu0
    %v201 = vmax.f32 %v198, 0.0
    %vm202 = vcmask 261120
    %203 = vst.msk [vmem:[#allocation2] sm:$0xff] %vm202, %v201
    %v204 = vld [vmem:[%s1] sm:$0x1]
    %v205 = vmul.f32 %v201, 0.01
    %v207 = vlaneseq
    %v208 = vshrl.u32 %v207, 7
    %v209 = vsub.s32 0, %v208
    %v210 = vrot.slane %v204, %v209
    %v212 = vadd.f32 %v210, %v205
    %v213 = vadd.f32 %v201, 1.010101
    %v214 = vmul.f32 %v213, 0.01
    %v215 = vadd.f32 %v214, 1.0
    %v216 = vrcp.pop %v215
    %v217 = vmul.f32 %v212, %v216
    %218 = vst.msk [vmem:[#allocation4] sm:$0xff] %vm202, %v217
    // Predicated region
    $region26: #{tpu_custom_call.1} parent=1 // pred_check
      _
    $region27: #{tpu_custom_call.1} parent=1 // pred_check_branch
      %220 = sbr.rel (0) target = $region29
    $region28: #{tpu_custom_call.1} parent=1 // pred_region
      %s222 = ssub.s32 128, 128
      %223 = vsyncadd [#allocation3], %s222
      %s225 = sshll.u32 [#allocation2], 4
      %s226 = int_to_ptr.vmem [resolvable:$true] %s225
      %228 = dma.vmem_to_hbm [thread:$0]  %s226, 128, %s6, [#allocation3]
    $region29: #{tpu_custom_call.1} parent=1 // pred_fallthru
      _
    // Predicated region
    $region30: #{tpu_custom_call.1} parent=1 // pred_check
      _
    $region31: #{tpu_custom_call.1} parent=1 // pred_check_branch
      %230 = sbr.rel (0) target = $region33
    $region32: #{tpu_custom_call.1} parent=1 // pred_region
      %s232 = ssub.s32 128, 128
      %233 = vsyncadd [#allocation5], %s232
      %s235 = sshll.u32 [#allocation4], 4
      %s236 = int_to_ptr.vmem [resolvable:$true] %s235
      %238 = dma.vmem_to_hbm [thread:$0]  %s236, 128, %s7, [#allocation5]
    $region33: #{tpu_custom_call.1} parent=1 // pred_fallthru
      _
    // Predicated region
    $region34: #{tpu_custom_call.1} parent=1 // pred_check
      _
    $region35: #{tpu_custom_call.1} parent=1 // pred_check_branch
      %240 = sbr.rel (0) target = $region37
    $region36: #{tpu_custom_call.1} parent=1 // pred_region
      %241 = dma.done [#allocation3], 128
    $region37: #{tpu_custom_call.1} parent=1 // pred_fallthru
      _
    // Predicated region
    $region38: #{tpu_custom_call.1} parent=1 // pred_check
      _
    $region39: #{tpu_custom_call.1} parent=1 // pred_check_branch
      %243 = sbr.rel (0) target = $region41
    $region40: #{tpu_custom_call.1} parent=1 // pred_region
      %244 = dma.done [#allocation5], 128
    $region41: #{tpu_custom_call.1} parent=1 // pred_fallthru
      _
    %245 = vsyncpa [#allocation3], 1
    %246 = vsyncpa [#allocation5], 1

</llo_original>
